<compile_context>
chip_gen: v6e
topology: v6e:2x2x1
jax: 0.10.0
libtpu: 0.0.40
codegen_flags: <defaults>
</compile_context>

<pallas_src>
import functools

import jax
import jax.numpy as jnp
from jax.experimental import pallas as pl
from jax.experimental.pallas import tpu as pltpu


def _round_up(x, m):
    return (x + m - 1) // m * m


def _round_down(x, m):
    return x // m * m


def joints_mse_kernel(pred_ref, gt_ref, w_ref, out_ref, *,
                      total_rows, tr, sublane_pack):
    """One row-tile of the flattened (B*J, H*W) heatmaps.

    Writes  sum_r w_r^2 * sum_hw (pred_r - gt_r)^2  over this tile's valid
    rows into out_ref[0, 0]; rows past total_rows (tail padding) are masked
    via jnp.where (select does not propagate the unselected branch).
    """
    t = pl.program_id(0)

    p = pred_ref[...].astype(jnp.float32)            # (TR, HW)
    g = gt_ref[...].astype(jnp.float32)              # (TR, HW)
    e = p - g
    row_ss = jnp.sum(e * e, axis=1, keepdims=True)   # (TR, 1)  XLU lane-reduce

    # Slice this tile's rows out of the resident whole-array weight block.
    start = t * tr
    if tr % sublane_pack == 0:
        start = pl.multiple_of(start, sublane_pack)
    w = w_ref[pl.ds(start, tr), :].astype(jnp.float32)   # (TR, 1)
    w2 = w * w                                           # square in VPU slack

    row_ids = t * tr + jax.lax.broadcasted_iota(jnp.int32, (tr, 1), 0)
    contrib = jnp.where(row_ids < total_rows, row_ss * w2, jnp.float32(0.0))
    out_ref[0, 0] = jnp.sum(contrib)


def joints_mse_loss(output, target, target_weight=None, use_target_weight=True):
    """Pallas implementation of JointsMSELoss.forward."""
    B, J, H, W = output.shape
    HW = H * W
    R = B * J  # total rows of the flattened view

    # Free (no-copy) contiguous views of the NCHW tensors.
    pred = output.reshape(R, HW)
    gt = target.reshape(R, HW)

    if use_target_weight and target_weight is not None:
        w = target_weight.reshape(R, 1).astype(jnp.float32)
    else:
        w = jnp.ones((R, 1), dtype=jnp.float32)

    itemsize = jnp.dtype(pred.dtype).itemsize
    # Sublane packing per dtype: f32 -> 8, bf16/f16 -> 16, int8/fp8 -> 32.
    sublane_pack = {4: 8, 2: 16, 1: 32}.get(itemsize, 8)

    # Generation-aware VMEM sizing (v7x: 64 MiB physical, v5e/v6e: 128 MiB).
    try:
        vmem_phys = getattr(pltpu.get_tpu_info(), "vmem_capacity_bytes",
                            64 * 1024 * 1024)
    except Exception:
        vmem_phys = 64 * 1024 * 1024  # conservative (v7x-safe) fallback
    if vmem_phys >= 128 * 1024 * 1024:
        target_tile_bytes = 14 * 1024 * 1024   # v5e / v6e
        vmem_limit_bytes = 96 * 1024 * 1024
    else:
        target_tile_bytes = 7 * 1024 * 1024    # v7x: 4 bufs x 7 MiB + w < 48 MiB
        vmem_limit_bytes = 48 * 1024 * 1024

    # Per-row VMEM footprint of a pred/gt tile uses the lane-padded width.
    bytes_per_row_tile = _round_up(HW, 128) * itemsize
    # Reserve room for the resident lane-padded (R_pad, 1) f32 weight block
    # (1 data lane pads to 128 lanes -> 512 B/row) plus tail-padding slack.
    w_resident_bytes = _round_up(R, sublane_pack) * 128 * 4 + 64 * 1024
    per_tile_budget = max(target_tile_bytes - w_resident_bytes // 4, 256 * 1024)

    # Row-tile size: multiple of the sublane pack, within the per-tile budget,
    # never larger than the (pack-rounded) row count.
    if R <= sublane_pack:
        tr = R
    else:
        tr_cap = _round_down(per_tile_budget // max(bytes_per_row_tile, 1),
                             sublane_pack)
        tr = max(sublane_pack, min(tr_cap, _round_down(R, sublane_pack)))
    num_tiles = pl.cdiv(R, tr)

    # Megacore (v7x): keep the "parallel" grid axis >= 2 steps when the
    # workload is big enough to matter, so the second TensorCore isn't idle.
    if (num_tiles == 1 and tr >= 2 * sublane_pack
            and R * bytes_per_row_tile > 2 * 1024 * 1024):
        tr = max(sublane_pack, _round_down(pl.cdiv(tr, 2), sublane_pack))
        num_tiles = pl.cdiv(R, tr)

    # Pad the weight vector so the in-kernel row slice never runs past it.
    R_pad = num_tiles * tr
    if R_pad > R:
        w = jnp.pad(w, ((0, R_pad - R), (0, 0)))

    kernel = functools.partial(joints_mse_kernel, total_rows=R, tr=tr,
                               sublane_pack=sublane_pack)

    partials = pl.pallas_call(
        kernel,
        out_shape=jax.ShapeDtypeStruct((num_tiles, 1), jnp.float32),
        grid_spec=pltpu.PrefetchScalarGridSpec(
            num_scalar_prefetch=0,
            grid=(num_tiles,),
            in_specs=[
                pl.BlockSpec((tr, HW), lambda t: (t, 0)),
                pl.BlockSpec((tr, HW), lambda t: (t, 0)),
                # Whole weight array, constant index: resident in VMEM,
                # loaded once; no per-step (tr, 1) DMA.
                pl.BlockSpec((R_pad, 1), lambda t: (0, 0)),
            ],
            out_specs=pl.BlockSpec(
                (1, 1), lambda t: (t, 0),
                memory_space=pltpu.MemorySpace.SMEM,
            ),
        ),
        compiler_params=pltpu.CompilerParams(
            dimension_semantics=("parallel",),
            vmem_limit_bytes=vmem_limit_bytes,
        ),
    )(pred, gt, w)

    # loss = sum_j 0.5 * mean_{b,hw}((w*(p-g))^2) / J
    #      = 0.5 * grand_weighted_sq_sum / (B*J*HW)
    return 0.5 * jnp.sum(partials) / jnp.float32(R * HW)


def joints_mse_loss_ref(output, target, target_weight=None, use_target_weight=True):
    """Pure-JAX reference matching the PyTorch forward exactly."""
    B, J, H, W = output.shape
    pred = output.reshape(B, J, -1)
    gt = target.reshape(B, J, -1)
    loss = jnp.float32(0.0)
    for idx in range(J):
        hp = pred[:, idx, :]
        hg = gt[:, idx, :]
        if use_target_weight:
            wgt = target_weight[:, idx]          # (B, 1), broadcasts over HW
            hp = hp * wgt
            hg = hg * wgt
        loss += 0.5 * jnp.mean((hp - hg) ** 2)
    return loss / J


if __name__ == "__main__":
    # Module config: use_target_weight=True (cfg unused in forward).
    use_target_weight = True

    B, J, H, W = 2, 4, 16, 16
    key = jax.random.PRNGKey(0)
    k1, k2, k3 = jax.random.split(key, 3)

    output = jax.random.normal(k1, (B, J, H, W), dtype=jnp.float32)
    target = jax.random.uniform(k2, (B, J, H, W), dtype=jnp.float32)
    target_weight = jax.random.uniform(k3, (B, J, 1), dtype=jnp.float32)

    loss = joints_mse_loss(output, target, target_weight, use_target_weight)
    loss = jax.block_until_ready(loss)

    ref = joints_mse_loss_ref(output, target, target_weight, use_target_weight)
    assert jnp.allclose(loss, ref, rtol=1e-5, atol=1e-6), (loss, ref)

    print("KERNEL_OK")
</pallas_src>

<mosaic_0001>
module attributes {stable_mosaic.version = 11 : i64} {
  func.func @joints_mse_kernel(%arg0: i32, %arg1: memref<8x256xf32, #tpu.memory_space<vmem>>, %arg2: memref<8x256xf32, #tpu.memory_space<vmem>>, %arg3: memref<8x1xf32, #tpu.memory_space<vmem>>, %arg4: memref<1x1xf32, #tpu.memory_space<smem>>) attributes {dimension_semantics = [#tpu.dimension_semantics<parallel>], iteration_bounds = array<i64: 1>, scalar_prefetch = 0 : i64, scratch_operands = 0 : i64, tpu.core_type = #tpu.core_type<tc>, window_params = [{transform_indices = @transform_0, window_bounds = array<i64: 8, 256>}, {transform_indices = @transform_1, window_bounds = array<i64: 8, 256>}, {pipeline_mode = #tpu.pipeline_mode<synchronous>, transform_indices = @transform_2, window_bounds = array<i64: 8, 1>}, {transform_indices = @transform_3, window_bounds = array<i64: 1, 1>}]} {
    %c0 = arith.constant 0 : index
    %c0_0 = arith.constant 0 : index
    %0 = vector.load %arg1[%c0, %c0_0] : memref<8x256xf32, #tpu.memory_space<vmem>>, vector<8x256xf32>
    %c0_1 = arith.constant 0 : index
    %c0_2 = arith.constant 0 : index
    %1 = vector.load %arg2[%c0_1, %c0_2] : memref<8x256xf32, #tpu.memory_space<vmem>>, vector<8x256xf32>
    %2 = arith.subf %0, %1 : vector<8x256xf32>
    %3 = arith.mulf %2, %2 : vector<8x256xf32>
    %cst = arith.constant dense<0.000000e+00> : vector<8xf32>
    %4 = vector.multi_reduction <add>, %3, %cst [1] : vector<8x256xf32> to vector<8xf32>
    %5 = vector.shape_cast %4 : vector<8xf32> to vector<8x1xf32>
    %c8_i32 = arith.constant 8 : i32
    %6 = arith.muli %arg0, %c8_i32 : i32
    %7 = tpu.assume_multiple %6, 8 : i32
    %8 = arith.index_cast %7 : i32 to index
    %c0_3 = arith.constant 0 : index
    %9 = vector.load %arg3[%8, %c0_3] : memref<8x1xf32, #tpu.memory_space<vmem>>, vector<8x1xf32>
    %10 = arith.mulf %9, %9 : vector<8x1xf32>
    %c8_i32_4 = arith.constant 8 : i32
    %11 = arith.muli %arg0, %c8_i32_4 : i32
    %12 = tpu.iota {dimensions = array<i32: 0>} : vector<8x1xi32>
    %13 = vector.broadcast %11 : i32 to vector<8x1xi32>
    %14 = arith.addi %13, %12 : vector<8x1xi32>
    %c8_i32_5 = arith.constant 8 : i32
    %15 = vector.broadcast %c8_i32_5 : i32 to vector<8x1xi32>
    %16 = arith.cmpi slt, %14, %15 : vector<8x1xi32>
    %17 = arith.mulf %5, %10 : vector<8x1xf32>
    %cst_6 = arith.constant 0.000000e+00 : f32
    %18 = vector.broadcast %cst_6 : f32 to vector<8x1xf32>
    %19 = arith.select %16, %17, %18 : vector<8x1xi1>, vector<8x1xf32>
    %20 = vector.shape_cast %19 : vector<8x1xf32> to vector<1x8x1xf32>
    %cst_7 = arith.constant dense<0.000000e+00> : vector<1xf32>
    %21 = vector.multi_reduction <add>, %20, %cst_7 [1, 2] : vector<1x8x1xf32> to vector<1xf32>
    %22 = vector.shape_cast %21 : vector<1xf32> to vector<1x1x1xf32>
    %23 = vector.extract %22[0, 0, 0] : f32 from vector<1x1x1xf32>
    %c0_8 = arith.constant 0 : index
    %c0_9 = arith.constant 0 : index
    %24 = memref.load %arg4[%c0_8, %c0_9] : memref<1x1xf32, #tpu.memory_space<smem>>
    memref.store %23, %arg4[%c0_8, %c0_9] : memref<1x1xf32, #tpu.memory_space<smem>>
    return
  }
  func.func @transform_0(%arg0: i32) -> (i32, i32) {
    %c0_i32 = arith.constant 0 : i32
    %c0_i32_0 = arith.constant 0 : i32
    return %arg0, %c0_i32 : i32, i32
  }
  func.func @transform_1(%arg0: i32) -> (i32, i32) {
    %c0_i32 = arith.constant 0 : i32
    %c0_i32_0 = arith.constant 0 : i32
    return %arg0, %c0_i32 : i32, i32
  }
  func.func @transform_2(%arg0: i32) -> (i32, i32) {
    %c0_i32 = arith.constant 0 : i32
    %c0_i32_0 = arith.constant 0 : i32
    %c0_i32_1 = arith.constant 0 : i32
    return %c0_i32, %c0_i32_0 : i32, i32
  }
  func.func @transform_3(%arg0: i32) -> (i32, i32) {
    %c0_i32 = arith.constant 0 : i32
    %c0_i32_0 = arith.constant 0 : i32
    return %arg0, %c0_i32 : i32, i32
  }
}

</mosaic_0001>

<llo_original>
// kernel: tpu_custom_call.1
$region0: #{tpu_custom_call.1}
  #allocation0 [shape = 'u32[]', space=smem, size = 0x4, offset = 0x4, fixed_abs, tag = 'smem constant byte address 0x4 - core index']
  #allocation1 [shape = 'u32[144,128]{1,0:T(1,128)}', space=vmem, size = 0x12000, scoped, tag = 'internal scratch']
  %s0 = inlined_call_operand.hbm [shape: f32[8,256], index: 0, kind: input, shape index: {}]
  %s1 = inlined_call_operand.hbm [shape: f32[8,256], index: 1, kind: input, shape index: {}]
  %s2 = inlined_call_operand.vmem [shape: f32[8,1], index: 2, kind: input, shape index: {}]
  %s3 = inlined_call_operand.hbm [shape: f32[1,1], index: 3, kind: output, shape index: {}]
  %s4 = sld [smem:[#allocation0]]
  $region30: #{tpu_custom_call.1} parent=0
    _
  %s6 = ssub.s32 1, %s4
  %s7 = scalar_select 0, %s6, %s4
  $region1: #{tpu_custom_call.1} parent=0
    #allocation2 [shape = 'u8[8192]{0}', space=vmem, size = 0x2000, scoped, tag = 'input window, operand 0, single buffered']
    #allocation3 [shape = 's32[1]{0}', space=sflag, size = 0x4, scoped, tag = 'scoped memory for tpu_custom_call.1']
    #allocation4 [shape = 's32[1]{0}', space=sflag, size = 0x4, scoped, tag = 'scoped memory for tpu_custom_call.1']
    #allocation5 [shape = 'u8[8192]{0}', space=vmem, size = 0x2000, scoped, tag = 'input window, operand 1, single buffered']
    #allocation6 [shape = 's32[1]{0}', space=sflag, size = 0x4, scoped, tag = 'scoped memory for tpu_custom_call.1']
    #allocation7 [shape = 'u8[512]{0}', space=smem, size = 0x200, scoped, tag = 'output window, operand 0, single buffered']
    %8 = vsyncpa [#allocation3], 0
    %9 = vsyncpa [#allocation6], 0
    %10 = vsyncpa [#allocation4], 0
    // Predicated region
    $region2: #{tpu_custom_call.1} parent=1 // pred_check
      _
    $region3: #{tpu_custom_call.1} parent=1 // pred_check_branch
      %12 = sbr.rel (0) target = $region5
    $region4: #{tpu_custom_call.1} parent=1 // pred_region
      %s14 = ssub.s32 256, 256
      %15 = vsyncadd [#allocation3], %s14
      %s17 = sshll.u32 [#allocation2], 4
      %s18 = int_to_ptr.vmem [resolvable:$true] %s17
      %20 = dma.hbm_to_vmem [thread:$0]  %s0, 256, %s18, [#allocation3]
    $region5: #{tpu_custom_call.1} parent=1 // pred_fallthru
      _
    // Predicated region
    $region6: #{tpu_custom_call.1} parent=1 // pred_check
      _
    $region7: #{tpu_custom_call.1} parent=1 // pred_check_branch
      %22 = sbr.rel (0) target = $region9
    $region8: #{tpu_custom_call.1} parent=1 // pred_region
      %s24 = ssub.s32 256, 256
      %25 = vsyncadd [#allocation6], %s24
      %s27 = sshll.u32 [#allocation5], 4
      %s28 = int_to_ptr.vmem [resolvable:$true] %s27
      %30 = dma.hbm_to_vmem [thread:$0]  %s1, 256, %s28, [#allocation6]
    $region9: #{tpu_custom_call.1} parent=1 // pred_fallthru
      _
    // Predicated region
    $region10: #{tpu_custom_call.1} parent=1 // pred_check
      _
    $region11: #{tpu_custom_call.1} parent=1 // pred_check_branch
      %32 = sbr.rel (0) target = $region13
    $region12: #{tpu_custom_call.1} parent=1 // pred_region
      _
    $region13: #{tpu_custom_call.1} parent=1 // pred_fallthru
      _
    // Predicated region
    $region14: #{tpu_custom_call.1} parent=1 // pred_check
      _
    $region15: #{tpu_custom_call.1} parent=1 // pred_check_branch
      %34 = sbr.rel (0) target = $region17
    $region16: #{tpu_custom_call.1} parent=1 // pred_region
      %35 = dma.done [#allocation3], 256
    $region17: #{tpu_custom_call.1} parent=1 // pred_fallthru
      _
    // Predicated region
    $region18: #{tpu_custom_call.1} parent=1 // pred_check
      _
    $region19: #{tpu_custom_call.1} parent=1 // pred_check_branch
      %37 = sbr.rel (0) target = $region21
    $region20: #{tpu_custom_call.1} parent=1 // pred_region
      %38 = dma.done [#allocation6], 256
    $region21: #{tpu_custom_call.1} parent=1 // pred_fallthru
      _
    %v39 = vld [vmem:[#allocation2] sm:$0xff]
    %v40 = vld [vmem:[#allocation2 + $0x8] sm:$0xff]
    %v41 = vld [vmem:[#allocation5] sm:$0xff]
    %v42 = vld [vmem:[#allocation5 + $0x8] sm:$0xff]
    %v43 = vsub.f32 %v39, %v41
    %v44 = vsub.f32 %v40, %v42
    %v45 = vmul.f32 %v43, %v43
    %v46 = vmul.f32 %v44, %v44
    %v47 = vadd.f32 %v45, %v46
    %48 = vadd.xlane.f32.xlu0 %v47
    %v49 = vpop.xlane.xlu0 %48
    %s50 = smul.u32 0, 8
    %s51 = scalar_lea.vmem %s2, %s50
    %v52 = vld [vmem:[%s51] sm:$0xff]
    %v53 = vmul.f32 %v52, %v52
    %v54 = vlaneseq
    %v55 = vshrl.u32 %v54, 7
    %v56 = vstv %s50
    %v57 = vadd.s32 %v56, %v55
    %vm58 = vcmp.lt.s32.totalorder %v57, 8
    %v59 = vmul.f32 %v49, %v53
    %v60 = vsel %vm58, %v59, 0.0
    %vm61 = vcmask 7168
    %v62 = vsel %vm61, %v60, 0.0
    %63 = vadd.xlane.f32.xlu0 %v62
    %v64 = vpop.xlane.xlu0 %63
    %v65 = vrot.slane %v64, 4
    %v66 = vadd.f32 %v64, %v65
    %v67 = vrot.slane %v66, 2
    %v68 = vadd.f32 %v66, %v67
    %v69 = vrot.slane %v68, 1
    %v70 = vadd.f32 %v68, %v69
    %s71 = vtos %v70
    %s72 = scalar_lea.smem [#allocation7], 0
    %73 = sst [smem:[%s72]] %s71
    // Predicated region
    $region22: #{tpu_custom_call.1} parent=1 // pred_check
      _
    $region23: #{tpu_custom_call.1} parent=1 // pred_check_branch
      %75 = sbr.rel (0) target = $region25
    $region24: #{tpu_custom_call.1} parent=1 // pred_region
      %s77 = ssub.s32 16, 16
      %78 = vsyncadd [#allocation4], %s77
      %81 = dma.smem_to_hbm [#allocation7], 16, %s3, [#allocation4]
    $region25: #{tpu_custom_call.1} parent=1 // pred_fallthru
      _
    // Predicated region
    $region26: #{tpu_custom_call.1} parent=1 // pred_check
      _
    $region27: #{tpu_custom_call.1} parent=1 // pred_check_branch
      %83 = sbr.rel (0) target = $region29
    $region28: #{tpu_custom_call.1} parent=1 // pred_region
      %84 = dma.done [#allocation4], 16
    $region29: #{tpu_custom_call.1} parent=1 // pred_fallthru
      _
    %85 = sfence
    %86 = vsyncpa [#allocation3], 1
    %87 = vsyncpa [#allocation6], 1
    %88 = vsyncpa [#allocation4], 1

</llo_original>
